<compile_context>
chip_gen: v6e
topology: v6e:2x2x1
jax: 0.10.0
libtpu: 0.0.40
codegen_flags: <defaults>
</compile_context>

<pallas_src>
import functools

import jax
import jax.numpy as jnp
from jax.experimental import pallas as pl
from jax.experimental.pallas import tpu as pltpu


# ----------------------------------------------------------------------------
# Small helpers
# ----------------------------------------------------------------------------
def _round_up(x, m):
    return ((x + m - 1) // m) * m


def _pad2(a, rows, cols):
    r, c = a.shape
    return jnp.pad(a, ((0, rows - r), (0, cols - c)))


def _pad1(v, n):
    return jnp.pad(v, (0, n - v.shape[0]))


def _vmem_budget_bytes():
    """~75% of physical VMEM, capped at 96 MiB (v5e/v6e: 128 MiB, v7x: 64 MiB)."""
    try:
        cap = int(pltpu.get_tpu_info().vmem_capacity_bytes)
    except Exception:  # pragma: no cover - defensive (AOT / unknown backend)
        cap = 64 * 1024 * 1024
    return min(96 * 1024 * 1024, (cap * 3) // 4)


def _pick_m_tile(n_p):
    """Largest M tile dividing n_p that still leaves >=2 blocks on the
    'parallel' axis (megacore: both v7x TensorCores stay busy)."""
    for t in (512, 256, 128):
        if n_p % t == 0 and n_p // t >= 2:
            return t
    return 128  # n_p == 128


def _pick_k_tile(n_p, tm, cw_in, cw_out, budget, x_resident):
    """Largest K tile whose double-buffered A stream + resident X + accumulator
    + output buffers fit the VMEM budget."""
    resident = 2 * n_p * cw_in if x_resident else 0
    fixed = (resident                       # resident bf16 X
             + tm * cw_in * 4               # f32 accumulator scratch
             + 2 * tm * cw_out * 4          # double-buffered output tile
             + 512 * 1024)                  # slack (W, bias, internal scratch)
    for tk in (2048, 1024, 512, 256, 128):
        if n_p % tk != 0:
            continue
        a_bufs = 2 * tm * tk * 2            # double-buffered bf16 A tile
        x_bufs = 0 if x_resident else 2 * tk * cw_in * 2
        if fixed + a_bufs + x_bufs <= budget:
            return tk
    return 128


# ----------------------------------------------------------------------------
# Pallas kernel: tiled aggregation matmul with fused W / bias / ReLU epilogue
#   out = act((A @ X) @ W + b)   == act(A @ (X @ W) + b)
# ----------------------------------------------------------------------------
def _gcn_conv_tiled_kernel(a_ref, x_ref, w_ref, b_ref, o_ref, acc_ref, *,
                           tk, apply_relu, x_resident):
    k = pl.program_id(1)

    @pl.when(k == 0)
    def _():
        acc_ref[...] = jnp.zeros_like(acc_ref)

    if x_resident:
        # X is fully VMEM-resident; slice the K chunk in-kernel.
        start = pl.multiple_of(k * tk, tk)
        x_blk = x_ref[pl.ds(start, tk), :]
    else:
        x_blk = x_ref[...]

    # bf16 x bf16 -> f32 accumulation on the MXU.
    acc_ref[...] += jnp.dot(a_ref[...], x_blk,
                            preferred_element_type=jnp.float32)

    @pl.when(k == pl.num_programs(1) - 1)
    def _():
        # Fused epilogue: small 128x128 feature transform + bias (+ ReLU).
        out = jnp.dot(acc_ref[...].astype(jnp.bfloat16), w_ref[...],
                      preferred_element_type=jnp.float32)
        out = out + b_ref[...]
        if apply_relu:
            out = jnp.maximum(out, 0.0)
        o_ref[...] = out.astype(o_ref.dtype)


def gcn_conv_tiled(a_bf, x_bf, w_bf, bias, *, apply_relu, out_dtype, budget):
    """One GCNConv layer (tiled/streaming path).

    a_bf:(N_p,N_p) bf16, x_bf:(N_p,Ci_p) bf16, w_bf:(Ci_p,Co_p) bf16,
    bias:(Co_p,) f32.  All dims are multiples of 128; N_p is a multiple of 512.
    """
    n_p = a_bf.shape[0]
    cw_in = x_bf.shape[1]
    cw_out = w_bf.shape[1]

    tm = _pick_m_tile(n_p)
    x_resident = 2 * n_p * cw_in <= budget // 3
    tk = _pick_k_tile(n_p, tm, cw_in, cw_out, budget, x_resident)
    grid = (n_p // tm, n_p // tk)

    if x_resident:
        x_spec = pl.BlockSpec((n_p, cw_in), lambda i, k: (0, 0))   # resident
    else:
        x_spec = pl.BlockSpec((tk, cw_in), lambda i, k: (k, 0))    # streamed

    kernel = functools.partial(_gcn_conv_tiled_kernel, tk=tk,
                               apply_relu=apply_relu, x_resident=x_resident)
    return pl.pallas_call(
        kernel,
        out_shape=jax.ShapeDtypeStruct((n_p, cw_out), out_dtype),
        grid_spec=pltpu.PrefetchScalarGridSpec(
            num_scalar_prefetch=0,
            grid=grid,
            in_specs=[
                pl.BlockSpec((tm, tk), lambda i, k: (i, k)),        # A (streamed)
                x_spec,                                             # X
                pl.BlockSpec((cw_in, cw_out), lambda i, k: (0, 0)),  # W (resident)
                pl.BlockSpec((1, cw_out), lambda i, k: (0, 0)),      # bias
            ],
            out_specs=pl.BlockSpec((tm, cw_out), lambda i, k: (i, 0)),
            scratch_shapes=[pltpu.VMEM((tm, cw_in), jnp.float32)],
        ),
        compiler_params=pltpu.CompilerParams(
            dimension_semantics=("parallel", "arbitrary"),
            vmem_limit_bytes=budget,
        ),
    )(a_bf, x_bf, w_bf, bias.reshape(1, cw_out).astype(jnp.float32))


# ----------------------------------------------------------------------------
# Small-graph fast path: the whole two-layer GCN in ONE fully-resident call
# ----------------------------------------------------------------------------
def _gcn_two_layer_fused_kernel(a_ref, x_ref, w1_ref, b1_ref, w2_ref, b2_ref,
                                o_ref):
    a = a_ref[...]
    ax = jnp.dot(a, x_ref[...], preferred_element_type=jnp.float32)
    h = jnp.dot(ax.astype(jnp.bfloat16), w1_ref[...],
                preferred_element_type=jnp.float32) + b1_ref[...]
    # Padded rows of h equal relu(b1); harmless because A's padded cols are 0.
    h = jnp.maximum(h, 0.0).astype(jnp.bfloat16)
    ah = jnp.dot(a, h, preferred_element_type=jnp.float32)
    out = jnp.dot(ah.astype(jnp.bfloat16), w2_ref[...],
                  preferred_element_type=jnp.float32) + b2_ref[...]
    o_ref[...] = out.astype(o_ref.dtype)


def gcn_two_layer_fused(a_bf, x_bf, w1_bf, b1, w2_bf, b2, *, out_dtype, budget):
    n_p = a_bf.shape[0]
    ci_p = x_bf.shape[1]
    h_p = w1_bf.shape[1]
    co_p = w2_bf.shape[1]
    return pl.pallas_call(
        _gcn_two_layer_fused_kernel,
        out_shape=jax.ShapeDtypeStruct((n_p, co_p), out_dtype),
        grid_spec=pltpu.PrefetchScalarGridSpec(
            num_scalar_prefetch=0,
            grid=(1,),
            in_specs=[
                pl.BlockSpec((n_p, n_p), lambda i: (0, 0)),
                pl.BlockSpec((n_p, ci_p), lambda i: (0, 0)),
                pl.BlockSpec((ci_p, h_p), lambda i: (0, 0)),
                pl.BlockSpec((1, h_p), lambda i: (0, 0)),
                pl.BlockSpec((h_p, co_p), lambda i: (0, 0)),
                pl.BlockSpec((1, co_p), lambda i: (0, 0)),
            ],
            out_specs=pl.BlockSpec((n_p, co_p), lambda i: (0, 0)),
        ),
        compiler_params=pltpu.CompilerParams(
            dimension_semantics=("arbitrary",),
            vmem_limit_bytes=budget,
        ),
    )(a_bf, x_bf, w1_bf, b1.reshape(1, h_p).astype(jnp.float32),
      w2_bf, b2.reshape(1, co_p).astype(jnp.float32))


# ----------------------------------------------------------------------------
# Plain-JAX glue: normalized adjacency (hoisted preprocessing) + parameter init
# ----------------------------------------------------------------------------
def normalized_adjacency(edge_index, num_nodes):
    """Dense D^-1/2 (A + I) D^-1/2 matching torch_geometric's gcn_norm.
    Pure per-graph preprocessing: compute ONCE, not per forward."""
    src = edge_index[0]
    dst = edge_index[1]
    loop = jnp.arange(num_nodes, dtype=edge_index.dtype)
    src = jnp.concatenate([src, loop])
    dst = jnp.concatenate([dst, loop])
    a = jnp.zeros((num_nodes, num_nodes), jnp.float32).at[dst, src].add(1.0)
    deg = a.sum(axis=1)
    dinv = jnp.where(deg > 0, 1.0 / jnp.sqrt(deg), 0.0)
    return dinv[:, None] * a * dinv[None, :]


def glorot(key, shape):
    fan_in, fan_out = shape
    limit = jnp.sqrt(6.0 / (fan_in + fan_out))
    return jax.random.uniform(key, shape, jnp.float32, -limit, limit)


def init_params(key, in_channels, hidden_channels, out_channels):
    k1, k2 = jax.random.split(key)
    return {
        "w1": glorot(k1, (in_channels, hidden_channels)),
        "b1": jnp.zeros((hidden_channels,), jnp.float32),
        "w2": glorot(k2, (hidden_channels, out_channels)),
        "b2": jnp.zeros((out_channels,), jnp.float32),
    }


# ----------------------------------------------------------------------------
# GCNModel forward: conv1 -> ReLU -> conv2
# ----------------------------------------------------------------------------
_SMALL_FUSED_MAX_NP = 1024  # fully-resident single-call path up to ~1k nodes


def gcn_model_forward(params, x, a_norm, *, force_tiled=False):
    n, c_in = x.shape
    hid = params["w1"].shape[1]
    c_out = params["w2"].shape[1]

    budget = _vmem_budget_bytes()

    ci_p = _round_up(c_in, 128)
    h_p = _round_up(hid, 128)
    co_p = _round_up(c_out, 128)

    n_p128 = _round_up(n, 128)
    use_fused = (not force_tiled) and (n_p128 <= _SMALL_FUSED_MAX_NP)
    # Tiled path: pad N to a multiple of 512 so the big M/K tiles always divide.
    n_p = n_p128 if use_fused else _round_up(n, 512)

    # Cast BEFORE padding so no padded f32 N_p^2 temporary is materialized.
    a_bf = _pad2(a_norm.astype(jnp.bfloat16), n_p, n_p)
    x_bf = _pad2(x.astype(jnp.bfloat16), n_p, ci_p)
    w1_bf = _pad2(params["w1"], ci_p, h_p).astype(jnp.bfloat16)
    w2_bf = _pad2(params["w2"], h_p, co_p).astype(jnp.bfloat16)
    b1_p = _pad1(params["b1"], h_p)
    b2_p = _pad1(params["b2"], co_p)

    if use_fused:
        out = gcn_two_layer_fused(a_bf, x_bf, w1_bf, b1_p, w2_bf, b2_p,
                                  out_dtype=jnp.float32, budget=budget)
    else:
        h = gcn_conv_tiled(a_bf, x_bf, w1_bf, b1_p, apply_relu=True,
                           out_dtype=jnp.bfloat16, budget=budget)
        out = gcn_conv_tiled(a_bf, h, w2_bf, b2_p, apply_relu=False,
                             out_dtype=jnp.float32, budget=budget)
    return out[:n, :c_out]


def gcn_model_forward_from_edges(params, x, edge_index):
    """Same signature as the PyTorch module's forward (x, edge_index)."""
    a_norm = normalized_adjacency(edge_index, x.shape[0])
    return gcn_model_forward(params, x, a_norm)


# ----------------------------------------------------------------------------
# Demo
# ----------------------------------------------------------------------------
if __name__ == "__main__":
    key = jax.random.PRNGKey(0)
    k_x, k_e, k_p = jax.random.split(key, 3)

    num_nodes = 16
    in_channels, hidden_channels, out_channels = 4, 32, 8
    num_edges = 32

    x = jax.random.normal(k_x, (num_nodes, in_channels), jnp.float32)
    edge_index = jax.random.randint(k_e, (2, num_edges), 0, num_nodes, jnp.int32)
    params = init_params(k_p, in_channels, hidden_channels, out_channels)

    # Hoisted preprocessing: adjacency normalization computed once per graph.
    a_norm = normalized_adjacency(edge_index, num_nodes)

    # Plain-JAX f32 reference (bf16 MXU operands -> loose tolerance).
    h_ref = jnp.maximum(a_norm @ x @ params["w1"] + params["b1"], 0.0)
    out_ref = a_norm @ h_ref @ params["w2"] + params["b2"]

    # Path 1: small-graph fully fused single pallas_call (default at N=16).
    fwd = jax.jit(gcn_model_forward)
    out = fwd(params, x, a_norm)
    jax.block_until_ready(out)
    assert out.shape == (num_nodes, out_channels)
    assert jnp.allclose(out, out_ref, rtol=5e-2, atol=5e-2)

    # Path 2: tiled/streaming path (forced, to exercise the large-graph kernel).
    fwd_tiled = jax.jit(functools.partial(gcn_model_forward, force_tiled=True))
    out_t = fwd_tiled(params, x, a_norm)
    jax.block_until_ready(out_t)
    assert out_t.shape == (num_nodes, out_channels)
    assert jnp.allclose(out_t, out_ref, rtol=5e-2, atol=5e-2)

    print("KERNEL_OK")
</pallas_src>

<mosaic_0001>
module attributes {stable_mosaic.version = 11 : i64} {
  func.func @_gcn_two_layer_fused_kernel(%arg0: i32, %arg1: memref<128x128xbf16, #tpu.memory_space<vmem>>, %arg2: memref<128x128xbf16, #tpu.memory_space<vmem>>, %arg3: memref<128x128xbf16, #tpu.memory_space<vmem>>, %arg4: memref<1x128xf32, #tpu.memory_space<vmem>>, %arg5: memref<128x128xbf16, #tpu.memory_space<vmem>>, %arg6: memref<1x128xf32, #tpu.memory_space<vmem>>, %arg7: memref<128x128xf32, #tpu.memory_space<vmem>>) attributes {dimension_semantics = [#tpu.dimension_semantics<arbitrary>], iteration_bounds = array<i64: 1>, scalar_prefetch = 0 : i64, scratch_operands = 0 : i64, tpu.core_type = #tpu.core_type<tc>, window_params = [{pipeline_mode = #tpu.pipeline_mode<synchronous>, transform_indices = @transform_0, window_bounds = array<i64: 128, 128>}, {pipeline_mode = #tpu.pipeline_mode<synchronous>, transform_indices = @transform_1, window_bounds = array<i64: 128, 128>}, {pipeline_mode = #tpu.pipeline_mode<synchronous>, transform_indices = @transform_2, window_bounds = array<i64: 128, 128>}, {pipeline_mode = #tpu.pipeline_mode<synchronous>, transform_indices = @transform_3, window_bounds = array<i64: 1, 128>}, {pipeline_mode = #tpu.pipeline_mode<synchronous>, transform_indices = @transform_4, window_bounds = array<i64: 128, 128>}, {pipeline_mode = #tpu.pipeline_mode<synchronous>, transform_indices = @transform_5, window_bounds = array<i64: 1, 128>}, {pipeline_mode = #tpu.pipeline_mode<synchronous>, transform_indices = @transform_6, window_bounds = array<i64: 128, 128>}]} {
    %c0 = arith.constant 0 : index
    %c0_0 = arith.constant 0 : index
    %0 = vector.load %arg1[%c0, %c0_0] : memref<128x128xbf16, #tpu.memory_space<vmem>>, vector<128x128xbf16>
    %c0_1 = arith.constant 0 : index
    %c0_2 = arith.constant 0 : index
    %1 = vector.load %arg2[%c0_1, %c0_2] : memref<128x128xbf16, #tpu.memory_space<vmem>>, vector<128x128xbf16>
    %cst = arith.constant dense<0.000000e+00> : vector<128x128xf32>
    %2 = tpu.matmul %0, %1, %cst {dimension_numbers = #tpu.dot_dimension_numbers<[1], [0], [0], [1], [0, 0, 1, 1], [], []>} : vector<128x128xbf16>, vector<128x128xbf16>, vector<128x128xf32> -> vector<128x128xf32>
    %3 = arith.truncf %2 : vector<128x128xf32> to vector<128x128xbf16>
    %c0_3 = arith.constant 0 : index
    %c0_4 = arith.constant 0 : index
    %4 = vector.load %arg3[%c0_3, %c0_4] : memref<128x128xbf16, #tpu.memory_space<vmem>>, vector<128x128xbf16>
    %cst_5 = arith.constant dense<0.000000e+00> : vector<128x128xf32>
    %5 = tpu.matmul %3, %4, %cst_5 {dimension_numbers = #tpu.dot_dimension_numbers<[1], [0], [0], [1], [0, 0, 1, 1], [], []>} : vector<128x128xbf16>, vector<128x128xbf16>, vector<128x128xf32> -> vector<128x128xf32>
    %c0_6 = arith.constant 0 : index
    %c0_7 = arith.constant 0 : index
    %6 = vector.load %arg4[%c0_6, %c0_7] : memref<1x128xf32, #tpu.memory_space<vmem>>, vector<1x128xf32>
    %7 = vector.broadcast %6 : vector<1x128xf32> to vector<128x128xf32>
    %8 = arith.addf %5, %7 : vector<128x128xf32>
    %cst_8 = arith.constant 0.000000e+00 : f32
    %9 = vector.broadcast %cst_8 : f32 to vector<128x128xf32>
    %10 = arith.maximumf %8, %9 : vector<128x128xf32>
    %11 = arith.truncf %10 : vector<128x128xf32> to vector<128x128xbf16>
    %cst_9 = arith.constant dense<0.000000e+00> : vector<128x128xf32>
    %12 = tpu.matmul %0, %11, %cst_9 {dimension_numbers = #tpu.dot_dimension_numbers<[1], [0], [0], [1], [0, 0, 1, 1], [], []>} : vector<128x128xbf16>, vector<128x128xbf16>, vector<128x128xf32> -> vector<128x128xf32>
    %13 = arith.truncf %12 : vector<128x128xf32> to vector<128x128xbf16>
    %c0_10 = arith.constant 0 : index
    %c0_11 = arith.constant 0 : index
    %14 = vector.load %arg5[%c0_10, %c0_11] : memref<128x128xbf16, #tpu.memory_space<vmem>>, vector<128x128xbf16>
    %cst_12 = arith.constant dense<0.000000e+00> : vector<128x128xf32>
    %15 = tpu.matmul %13, %14, %cst_12 {dimension_numbers = #tpu.dot_dimension_numbers<[1], [0], [0], [1], [0, 0, 1, 1], [], []>} : vector<128x128xbf16>, vector<128x128xbf16>, vector<128x128xf32> -> vector<128x128xf32>
    %c0_13 = arith.constant 0 : index
    %c0_14 = arith.constant 0 : index
    %16 = vector.load %arg6[%c0_13, %c0_14] : memref<1x128xf32, #tpu.memory_space<vmem>>, vector<1x128xf32>
    %17 = vector.broadcast %16 : vector<1x128xf32> to vector<128x128xf32>
    %18 = arith.addf %15, %17 : vector<128x128xf32>
    %c0_15 = arith.constant 0 : index
    %c0_16 = arith.constant 0 : index
    %19 = vector.load %arg7[%c0_15, %c0_16] : memref<128x128xf32, #tpu.memory_space<vmem>>, vector<128x128xf32>
    tpu.vector_store %arg7[%c0_15, %c0_16], %18 {strides = array<i32>} : memref<128x128xf32, #tpu.memory_space<vmem>>, vector<128x128xf32>,
    return
  }
  func.func @transform_0(%arg0: i32) -> (i32, i32) {
    %c0_i32 = arith.constant 0 : i32
    %c0_i32_0 = arith.constant 0 : i32
    %c0_i32_1 = arith.constant 0 : i32
    return %c0_i32, %c0_i32_0 : i32, i32
  }
  func.func @transform_1(%arg0: i32) -> (i32, i32) {
    %c0_i32 = arith.constant 0 : i32
    %c0_i32_0 = arith.constant 0 : i32
    %c0_i32_1 = arith.constant 0 : i32
    return %c0_i32, %c0_i32_0 : i32, i32
  }
  func.func @transform_2(%arg0: i32) -> (i32, i32) {
    %c0_i32 = arith.constant 0 : i32
    %c0_i32_0 = arith.constant 0 : i32
    %c0_i32_1 = arith.constant 0 : i32
    return %c0_i32, %c0_i32_0 : i32, i32
  }
  func.func @transform_3(%arg0: i32) -> (i32, i32) {
    %c0_i32 = arith.constant 0 : i32
    %c0_i32_0 = arith.constant 0 : i32
    %c0_i32_1 = arith.constant 0 : i32
    return %c0_i32, %c0_i32_0 : i32, i32
  }
  func.func @transform_4(%arg0: i32) -> (i32, i32) {
    %c0_i32 = arith.constant 0 : i32
    %c0_i32_0 = arith.constant 0 : i32
    %c0_i32_1 = arith.constant 0 : i32
    return %c0_i32, %c0_i32_0 : i32, i32
  }
  func.func @transform_5(%arg0: i32) -> (i32, i32) {
    %c0_i32 = arith.constant 0 : i32
    %c0_i32_0 = arith.constant 0 : i32
    %c0_i32_1 = arith.constant 0 : i32
    return %c0_i32, %c0_i32_0 : i32, i32
  }
  func.func @transform_6(%arg0: i32) -> (i32, i32) {
    %c0_i32 = arith.constant 0 : i32
    %c0_i32_0 = arith.constant 0 : i32
    %c0_i32_1 = arith.constant 0 : i32
    return %c0_i32, %c0_i32_0 : i32, i32
  }
}

</mosaic_0001>

<llo_original>
// kernel: gcn_model_forward.1
$region0: #{gcn_model_forward.1}
  #allocation0 [shape = 'u32[]', space=smem, size = 0x4, offset = 0x4, fixed_abs, tag = 'smem constant byte address 0x4 - core index']
  #allocation1 [shape = 'u32[144,128]{1,0:T(1,128)}', space=vmem, size = 0x12000, scoped, tag = 'internal scratch']
  %s0 = inlined_call_operand.vmem [shape: bf16[128,128], index: 0, kind: input, shape index: {}]
  %s1 = inlined_call_operand.vmem [shape: bf16[128,128], index: 1, kind: input, shape index: {}]
  %s2 = inlined_call_operand.vmem [shape: bf16[128,128], index: 2, kind: input, shape index: {}]
  %s3 = inlined_call_operand.vmem [shape: f32[1,128], index: 3, kind: input, shape index: {}]
  %s4 = inlined_call_operand.vmem [shape: bf16[128,128], index: 4, kind: input, shape index: {}]
  %s5 = inlined_call_operand.vmem [shape: f32[1,128], index: 5, kind: input, shape index: {}]
  %s6 = inlined_call_operand.vmem [shape: f32[128,128], index: 6, kind: output, shape index: {}]
  %s7 = sld [smem:[#allocation0]]
  $region34: #{gcn_model_forward.1} parent=0
    _
  %s9 = ssub.s32 1, %s7
  %s10 = scalar_select 0, %s9, %s7
  // Predicated region
  $region2: #{gcn_model_forward.1} parent=0 // pred_check
    _
  $region3: #{gcn_model_forward.1} parent=0 // pred_check_branch
    %12 = sbr.rel (0) target = $region5
  $region4: #{gcn_model_forward.1} parent=0 // pred_region
    _
  $region5: #{gcn_model_forward.1} parent=0 // pred_fallthru
    _
  // Predicated region
  $region6: #{gcn_model_forward.1} parent=0 // pred_check
    _
  $region7: #{gcn_model_forward.1} parent=0 // pred_check_branch
    %14 = sbr.rel (0) target = $region9
  $region8: #{gcn_model_forward.1} parent=0 // pred_region
    _
  $region9: #{gcn_model_forward.1} parent=0 // pred_fallthru
    _
  // Predicated region
  $region10: #{gcn_model_forward.1} parent=0 // pred_check
    _
  $region11: #{gcn_model_forward.1} parent=0 // pred_check_branch
    %16 = sbr.rel (0) target = $region13
  $region12: #{gcn_model_forward.1} parent=0 // pred_region
    _
  $region13: #{gcn_model_forward.1} parent=0 // pred_fallthru
    _
  // Predicated region
  $region14: #{gcn_model_forward.1} parent=0 // pred_check
    _
  $region15: #{gcn_model_forward.1} parent=0 // pred_check_branch
    %18 = sbr.rel (0) target = $region17
  $region16: #{gcn_model_forward.1} parent=0 // pred_region
    _
  $region17: #{gcn_model_forward.1} parent=0 // pred_fallthru
    _
  // Predicated region
  $region18: #{gcn_model_forward.1} parent=0 // pred_check
    _
  $region19: #{gcn_model_forward.1} parent=0 // pred_check_branch
    %20 = sbr.rel (0) target = $region21
  $region20: #{gcn_model_forward.1} parent=0 // pred_region
    _
  $region21: #{gcn_model_forward.1} parent=0 // pred_fallthru
    _
  // Predicated region
  $region22: #{gcn_model_forward.1} parent=0 // pred_check
    _
  $region23: #{gcn_model_forward.1} parent=0 // pred_check_branch
    %22 = sbr.rel (0) target = $region25
  $region24: #{gcn_model_forward.1} parent=0 // pred_region
    _
  $region25: #{gcn_model_forward.1} parent=0 // pred_fallthru
    _
  %v24 = vld [vmem:[%s0] sm:$0xf]
  %v25 = vld [vmem:[%s0 + $0x4] sm:$0xf]
  %v26 = vld [vmem:[%s0 + $0x8] sm:$0xf]
  %v27 = vld [vmem:[%s0 + $0xc] sm:$0xf]
  %v28 = vld [vmem:[%s0 + $0x10] sm:$0xf]
  %v29 = vld [vmem:[%s0 + $0x14] sm:$0xf]
  %v30 = vld [vmem:[%s0 + $0x18] sm:$0xf]
  %v31 = vld [vmem:[%s0 + $0x1c] sm:$0xf]
  %v32 = vld [vmem:[%s0 + $0x20] sm:$0xf]
  %v33 = vld [vmem:[%s0 + $0x24] sm:$0xf]
  %v34 = vld [vmem:[%s0 + $0x28] sm:$0xf]
  %v35 = vld [vmem:[%s0 + $0x2c] sm:$0xf]
  %v36 = vld [vmem:[%s0 + $0x30] sm:$0xf]
  %v37 = vld [vmem:[%s0 + $0x34] sm:$0xf]
  %v38 = vld [vmem:[%s0 + $0x38] sm:$0xf]
  %v39 = vld [vmem:[%s0 + $0x3c] sm:$0xf]
  %v40 = vld [vmem:[%s1] sm:$0xf]
  %v41 = vld [vmem:[%s1 + $0x4] sm:$0xf]
  %v42 = vld [vmem:[%s1 + $0x8] sm:$0xf]
  %v43 = vld [vmem:[%s1 + $0xc] sm:$0xf]
  %v44 = vld [vmem:[%s1 + $0x10] sm:$0xf]
  %v45 = vld [vmem:[%s1 + $0x14] sm:$0xf]
  %v46 = vld [vmem:[%s1 + $0x18] sm:$0xf]
  %v47 = vld [vmem:[%s1 + $0x1c] sm:$0xf]
  %v48 = vld [vmem:[%s1 + $0x20] sm:$0xf]
  %v49 = vld [vmem:[%s1 + $0x24] sm:$0xf]
  %v50 = vld [vmem:[%s1 + $0x28] sm:$0xf]
  %v51 = vld [vmem:[%s1 + $0x2c] sm:$0xf]
  %v52 = vld [vmem:[%s1 + $0x30] sm:$0xf]
  %v53 = vld [vmem:[%s1 + $0x34] sm:$0xf]
  %v54 = vld [vmem:[%s1 + $0x38] sm:$0xf]
  %v55 = vld [vmem:[%s1 + $0x3c] sm:$0xf]
  %v72 = vunpack.c.l.b16 %v24
  %v73 = vunpack.c.l.b16 %v25
  %v74 = vunpack.c.l.b16 %v26
  %v75 = vunpack.c.l.b16 %v27
  %v76 = vunpack.c.l.b16 %v28
  %v77 = vunpack.c.l.b16 %v29
  %v78 = vunpack.c.l.b16 %v30
  %v79 = vunpack.c.l.b16 %v31
  %v80 = vunpack.c.l.b16 %v32
  %v81 = vunpack.c.l.b16 %v33
  %v82 = vunpack.c.l.b16 %v34
  %v83 = vunpack.c.l.b16 %v35
  %v84 = vunpack.c.l.b16 %v36
  %v85 = vunpack.c.l.b16 %v37
  %v86 = vunpack.c.l.b16 %v38
  %v87 = vunpack.c.l.b16 %v39
  %v88 = vpack.c.b16 %v73, %v72
  %v89 = vpack.c.b16 %v75, %v74
  %v90 = vpack.c.b16 %v77, %v76
  %v91 = vpack.c.b16 %v79, %v78
  %v92 = vpack.c.b16 %v81, %v80
  %v93 = vpack.c.b16 %v83, %v82
  %v94 = vpack.c.b16 %v85, %v84
  %v95 = vpack.c.b16 %v87, %v86
  %v120 = vunpack.c.l.b16 %v40
  %v121 = vunpack.c.l.b16 %v41
  %v122 = vunpack.c.l.b16 %v42
  %v123 = vunpack.c.l.b16 %v43
  %v124 = vunpack.c.l.b16 %v44
  %v125 = vunpack.c.l.b16 %v45
  %v126 = vunpack.c.l.b16 %v46
  %v127 = vunpack.c.l.b16 %v47
  %v128 = vunpack.c.l.b16 %v48
  %v129 = vunpack.c.l.b16 %v49
  %v130 = vunpack.c.l.b16 %v50
  %v131 = vunpack.c.l.b16 %v51
  %v132 = vunpack.c.l.b16 %v52
  %v133 = vunpack.c.l.b16 %v53
  %v134 = vunpack.c.l.b16 %v54
  %v135 = vunpack.c.l.b16 %v55
  %v136 = vpack.c.b16 %v121, %v120
  %v137 = vpack.c.b16 %v123, %v122
  %v138 = vpack.c.b16 %v125, %v124
  %v139 = vpack.c.b16 %v127, %v126
  %v140 = vpack.c.b16 %v129, %v128
  %v141 = vpack.c.b16 %v131, %v130
  %v142 = vpack.c.b16 %v133, %v132
  %v143 = vpack.c.b16 %v135, %v134
  %152 = vmatprep.subr.bf16.mxu0 0
  %153 = vmatpush1.bf16.msra.mxu0 %v143
  %154 = vmatprep.subr.bf16.mxu0 0
  %155 = vmatpush1.bf16.msra.mxu0 %v142
  %156 = vmatprep.subr.bf16.mxu0 0
  %157 = vmatpush1.bf16.msra.mxu0 %v141
  %158 = vmatprep.subr.bf16.mxu0 0
  %159 = vmatpush1.bf16.msra.mxu0 %v140
  %160 = vmatprep.subr.bf16.mxu0 0
  %161 = vmatpush1.bf16.msra.mxu0 %v139
  %162 = vmatprep.subr.bf16.mxu0 0
  %163 = vmatpush1.bf16.msra.mxu0 %v138
  %164 = vmatprep.subr.bf16.mxu0 0
  %165 = vmatpush1.bf16.msra.mxu0 %v137
  %166 = vmatprep.subr.bf16.mxu0 0
  %167 = vmatpush1.bf16.msra.mxu0 %v136
  %168 = vmatprep.subr.bf16.mxu0 0
  %169 = vmatpush2.bf16.msra.mxu0 0
  %170 = vmatprep.subr.bf16.mxu0 0
  %171 = vmatpush2.bf16.msra.mxu0 0
  %172 = vmatprep.subr.bf16.mxu0 0
  %173 = vmatpush2.bf16.msra.mxu0 0
  %174 = vmatprep.subr.bf16.mxu0 0
  %175 = vmatpush2.bf16.msra.mxu0 0
  %176 = vmatprep.subr.bf16.mxu0 0
  %177 = vmatpush2.bf16.msra.mxu0 0
  %178 = vmatprep.subr.bf16.mxu0 0
  %179 = vmatpush2.bf16.msra.mxu0 0
  %180 = vmatprep.subr.bf16.mxu0 0
  %181 = vmatpush2.bf16.msra.mxu0 0
  %182 = vmatprep.subr.bf16.mxu0 0
  %183 = vmatpush2.bf16.msra.mxu0 0
  %184 = vmatprep.mubr.bf16.mxu0 0
  %185 = vmatmul.mubr.bf16.gmra.mxu0 %v88
  %v186 = vpop.f32.mrf.mxu0
  %v187 = vadd.f32 0.0, %v186
  %v188 = vpop.f32.mrf.mxu0
  %v189 = vpop.f32.mrf.mxu0
  %v190 = vadd.f32 0.0, %v189
  %v191 = vpop.f32.mrf.mxu0
  %192 = vmatprep.mubr.bf16.mxu0 0
  %193 = vmatmul.mubr.bf16.gmra.mxu0 %v89
  %v194 = vpop.f32.mrf.mxu0
  %v195 = vadd.f32 0.0, %v194
  %v196 = vpop.f32.mrf.mxu0
  %v197 = vpop.f32.mrf.mxu0
  %v198 = vadd.f32 0.0, %v197
  %v199 = vpop.f32.mrf.mxu0
  %200 = vmatprep.mubr.bf16.mxu0 0
  %201 = vmatmul.mubr.bf16.gmra.mxu0 %v90
  %v202 = vpop.f32.mrf.mxu0
  %v203 = vadd.f32 0.0, %v202
  %v204 = vpop.f32.mrf.mxu0
  %v205 = vpop.f32.mrf.mxu0
  %v206 = vadd.f32 0.0, %v205
  %v207 = vpop.f32.mrf.mxu0
  %208 = vmatprep.mubr.bf16.mxu0 0
  %209 = vmatmul.mubr.bf16.gmra.mxu0 %v91
  %v210 = vpop.f32.mrf.mxu0
  %v211 = vadd.f32 0.0, %v210
  %v212 = vpop.f32.mrf.mxu0
  %v213 = vpop.f32.mrf.mxu0
  %v214 = vadd.f32 0.0, %v213
  %v215 = vpop.f32.mrf.mxu0
  %216 = vmatprep.mubr.bf16.mxu0 0
  %217 = vmatmul.mubr.bf16.gmra.mxu0 %v92
  %v218 = vpop.f32.mrf.mxu0
  %v219 = vadd.f32 0.0, %v218
  %v220 = vpop.f32.mrf.mxu0
  %v221 = vpop.f32.mrf.mxu0
  %v222 = vadd.f32 0.0, %v221
  %v223 = vpop.f32.mrf.mxu0
  %224 = vmatprep.mubr.bf16.mxu0 0
  %225 = vmatmul.mubr.bf16.gmra.mxu0 %v93
  %v226 = vpop.f32.mrf.mxu0
  %v227 = vadd.f32 0.0, %v226
  %v228 = vpop.f32.mrf.mxu0
  %v229 = vpop.f32.mrf.mxu0
  %v230 = vadd.f32 0.0, %v229
  %v231 = vpop.f32.mrf.mxu0
  %232 = vmatprep.mubr.bf16.mxu0 0
  %233 = vmatmul.mubr.bf16.gmra.mxu0 %v94
  %v234 = vpop.f32.mrf.mxu0
  %v235 = vadd.f32 0.0, %v234
  %v236 = vpop.f32.mrf.mxu0
  %v237 = vpop.f32.mrf.mxu0
  %v238 = vadd.f32 0.0, %v237
  %v239 = vpop.f32.mrf.mxu0
  %240 = vmatprep.mubr.bf16.mxu0 0
  %241 = vmatmul.mubr.bf16.gmra.mxu0 %v95
  %v242 = vpop.f32.mrf.mxu0
  %v243 = vadd.f32 0.0, %v242
  %v244 = vpop.f32.mrf.mxu0
  %v245 = vpop.f32.mrf.mxu0
  %v246 = vadd.f32 0.0, %v245
  %v247 = vpop.f32.mrf.mxu0
  %248 = vdwg.mxu0
  %v249 = vpack.c.bf16 %v190, %v187
  %v250 = vpack.c.bf16 %v198, %v195
  %v251 = vpack.c.bf16 %v206, %v203
  %v252 = vpack.c.bf16 %v214, %v211
  %v253 = vpack.c.bf16 %v222, %v219
  %v254 = vpack.c.bf16 %v230, %v227
  %v255 = vpack.c.bf16 %v238, %v235
  %v256 = vpack.c.bf16 %v246, %v243
  %v257 = vld [vmem:[%s2] sm:$0xf]
  %v258 = vld [vmem:[%s2 + $0x4] sm:$0xf]
  %v259 = vld [vmem:[%s2 + $0x8] sm:$0xf]
  %v260 = vld [vmem:[%s2 + $0xc] sm:$0xf]
  %v261 = vld [vmem:[%s2 + $0x10] sm:$0xf]
  %v262 = vld [vmem:[%s2 + $0x14] sm:$0xf]
  %v263 = vld [vmem:[%s2 + $0x18] sm:$0xf]
  %v264 = vld [vmem:[%s2 + $0x1c] sm:$0xf]
  %v265 = vld [vmem:[%s2 + $0x20] sm:$0xf]
  %v266 = vld [vmem:[%s2 + $0x24] sm:$0xf]
  %v267 = vld [vmem:[%s2 + $0x28] sm:$0xf]
  %v268 = vld [vmem:[%s2 + $0x2c] sm:$0xf]
  %v269 = vld [vmem:[%s2 + $0x30] sm:$0xf]
  %v270 = vld [vmem:[%s2 + $0x34] sm:$0xf]
  %v271 = vld [vmem:[%s2 + $0x38] sm:$0xf]
  %v272 = vld [vmem:[%s2 + $0x3c] sm:$0xf]
  %v273 = vld [vmem:[%s3] sm:$0x1]
  %v275 = vlaneseq
  %v276 = vshrl.u32 %v275, 7
  %v277 = vsub.s32 0, %v276
  %v278 = vrot.slane %v273, %v277
  %v296 = vunpack.c.l.b16 %v257
  %v297 = vunpack.c.l.b16 %v258
  %v298 = vunpack.c.l.b16 %v259
  %v299 = vunpack.c.l.b16 %v260
  %v300 = vunpack.c.l.b16 %v261
  %v301 = vunpack.c.l.b16 %v262
  %v302 = vunpack.c.l.b16 %v263
  %v303 = vunpack.c.l.b16 %v264
  %v304 = vunpack.c.l.b16 %v265
  %v305 = vunpack.c.l.b16 %v266
  %v306 = vunpack.c.l.b16 %v267
  %v307 = vunpack.c.l.b16 %v268
  %v308 = vunpack.c.l.b16 %v269
  %v309 = vunpack.c.l.b16 %v270
  %v310 = vunpack.c.l.b16 %v271
  %v311 = vunpack.c.l.b16 %v272
  %v312 = vpack.c.b16 %v297, %v296
  %v313 = vpack.c.b16 %v299, %v298
  %v314 = vpack.c.b16 %v301, %v300
  %v315 = vpack.c.b16 %v303, %v302
  %v316 = vpack.c.b16 %v305, %v304
  %v317 = vpack.c.b16 %v307, %v306
  %v318 = vpack.c.b16 %v309, %v308
  %v319 = vpack.c.b16 %v311, %v310
  %328 = vmatprep.subr.bf16.mxu0 0
  %329 = vmatpush1.bf16.msra.mxu0 %v319
  %330 = vmatprep.subr.bf16.mxu0 0
  %331 = vmatpush1.bf16.msra.mxu0 %v318
  %332 = vmatprep.subr.bf16.mxu0 0
  %333 = vmatpush1.bf16.msra.mxu0 %v317
  %334 = vmatprep.subr.bf16.mxu0 0
  %335 = vmatpush1.bf16.msra.mxu0 %v316
  %336 = vmatprep.subr.bf16.mxu0 0
  %337 = vmatpush1.bf16.msra.mxu0 %v315
  %338 = vmatprep.subr.bf16.mxu0 0
  %339 = vmatpush1.bf16.msra.mxu0 %v314
  %340 = vmatprep.subr.bf16.mxu0 0
  %341 = vmatpush1.bf16.msra.mxu0 %v313
  %342 = vmatprep.subr.bf16.mxu0 0
  %343 = vmatpush1.bf16.msra.mxu0 %v312
  %344 = vmatprep.subr.bf16.mxu0 0
  %345 = vmatpush2.bf16.msra.mxu0 0
  %346 = vmatprep.subr.bf16.mxu0 0
  %347 = vmatpush2.bf16.msra.mxu0 0
  %348 = vmatprep.subr.bf16.mxu0 0
  %349 = vmatpush2.bf16.msra.mxu0 0
  %350 = vmatprep.subr.bf16.mxu0 0
  %351 = vmatpush2.bf16.msra.mxu0 0
  %352 = vmatprep.subr.bf16.mxu0 0
  %353 = vmatpush2.bf16.msra.mxu0 0
  %354 = vmatprep.subr.bf16.mxu0 0
  %355 = vmatpush2.bf16.msra.mxu0 0
  %356 = vmatprep.subr.bf16.mxu0 0
  %357 = vmatpush2.bf16.msra.mxu0 0
  %358 = vmatprep.subr.bf16.mxu0 0
  %359 = vmatpush2.bf16.msra.mxu0 0
  %360 = vmatprep.mubr.bf16.mxu0 0
  %361 = vmatmul.mubr.bf16.gmra.mxu0 %v249
  %v362 = vpop.f32.mrf.mxu0
  %v363 = vadd.f32 %v278, %v362
  %v364 = vpop.f32.mrf.mxu0
  %v365 = vpop.f32.mrf.mxu0
  %v366 = vadd.f32 %v278, %v365
  %v367 = vpop.f32.mrf.mxu0
  %368 = vmatprep.mubr.bf16.mxu0 0
  %369 = vmatmul.mubr.bf16.gmra.mxu0 %v250
  %v370 = vpop.f32.mrf.mxu0
  %v371 = vadd.f32 %v278, %v370
  %v372 = vpop.f32.mrf.mxu0
  %v373 = vpop.f32.mrf.mxu0
  %v374 = vadd.f32 %v278, %v373
  %v375 = vpop.f32.mrf.mxu0
  %376 = vmatprep.mubr.bf16.mxu0 0
  %377 = vmatmul.mubr.bf16.gmra.mxu0 %v251
  %v378 = vpop.f32.mrf.mxu0
  %v379 = vadd.f32 %v278, %v378
  %v380 = vpop.f32.mrf.mxu0
  %v381 = vpop.f32.mrf.mxu0
  %v382 = vadd.f32 %v278, %v381
  %v383 = vpop.f32.mrf.mxu0
  %384 = vmatprep.mubr.bf16.mxu0 0
  %385 = vmatmul.mubr.bf16.gmra.mxu0 %v252
  %v386 = vpop.f32.mrf.mxu0
  %v387 = vadd.f32 %v278, %v386
  %v388 = vpop.f32.mrf.mxu0
  %v389 = vpop.f32.mrf.mxu0
  %v390 = vadd.f32 %v278, %v389
  %v391 = vpop.f32.mrf.mxu0
  %392 = vmatprep.mubr.bf16.mxu0 0
  %393 = vmatmul.mubr.bf16.gmra.mxu0 %v253
  %v394 = vpop.f32.mrf.mxu0
  %v395 = vadd.f32 %v278, %v394
  %v396 = vpop.f32.mrf.mxu0
  %v397 = vpop.f32.mrf.mxu0
  %v398 = vadd.f32 %v278, %v397
  %v399 = vpop.f32.mrf.mxu0
  %400 = vmatprep.mubr.bf16.mxu0 0
  %401 = vmatmul.mubr.bf16.gmra.mxu0 %v254
  %v402 = vpop.f32.mrf.mxu0
  %v403 = vadd.f32 %v278, %v402
  %v404 = vpop.f32.mrf.mxu0
  %v405 = vpop.f32.mrf.mxu0
  %v406 = vadd.f32 %v278, %v405
  %v407 = vpop.f32.mrf.mxu0
  %408 = vmatprep.mubr.bf16.mxu0 0
  %409 = vmatmul.mubr.bf16.gmra.mxu0 %v255
  %v410 = vpop.f32.mrf.mxu0
  %v411 = vadd.f32 %v278, %v410
  %v412 = vpop.f32.mrf.mxu0
  %v413 = vpop.f32.mrf.mxu0
  %v414 = vadd.f32 %v278, %v413
  %v415 = vpop.f32.mrf.mxu0
  %416 = vmatprep.mubr.bf16.mxu0 0
  %417 = vmatmul.mubr.bf16.gmra.mxu0 %v256
  %v418 = vpop.f32.mrf.mxu0
  %v419 = vadd.f32 %v278, %v418
  %v420 = vpop.f32.mrf.mxu0
  %v421 = vpop.f32.mrf.mxu0
  %v422 = vadd.f32 %v278, %v421
  %v423 = vpop.f32.mrf.mxu0
  %424 = vdwg.mxu0
  %v425 = vmax.f32 %v363, 0.0
  %v426 = vmax.f32 %v366, 0.0
  %v427 = vmax.f32 %v371, 0.0
  %v428 = vmax.f32 %v374, 0.0
  %v429 = vmax.f32 %v379, 0.0
  %v430 = vmax.f32 %v382, 0.0
  %v431 = vmax.f32 %v387, 0.0
  %v432 = vmax.f32 %v390, 0.0
  %v433 = vmax.f32 %v395, 0.0
  %v434 = vmax.f32 %v398, 0.0
  %v435 = vmax.f32 %v403, 0.0
  %v436 = vmax.f32 %v406, 0.0
  %v437 = vmax.f32 %v411, 0.0
  %v438 = vmax.f32 %v414, 0.0
  %v439 = vmax.f32 %v419, 0.0
  %v440 = vmax.f32 %v422, 0.0
  %v441 = vpack.c.bf16 %v426, %v425
  %v442 = vpack.c.bf16 %v428, %v427
  %v443 = vpack.c.bf16 %v430, %v429
  %v444 = vpack.c.bf16 %v432, %v431
  %v445 = vpack.c.bf16 %v434, %v433
  %v446 = vpack.c.bf16 %v436, %v435
  %v447 = vpack.c.bf16 %v438, %v437
  %v448 = vpack.c.bf16 %v440, %v439
  %449 = vmatprep.subr.bf16.mxu0 0
  %450 = vmatpush1.bf16.msra.mxu0 %v448
  %451 = vmatprep.subr.bf16.mxu0 0
  %452 = vmatpush1.bf16.msra.mxu0 %v447
  %453 = vmatprep.subr.bf16.mxu0 0
  %454 = vmatpush1.bf16.msra.mxu0 %v446
  %455 = vmatprep.subr.bf16.mxu0 0
  %456 = vmatpush1.bf16.msra.mxu0 %v445
  %457 = vmatprep.subr.bf16.mxu0 0
  %458 = vmatpush1.bf16.msra.mxu0 %v444
  %459 = vmatprep.subr.bf16.mxu0 0
  %460 = vmatpush1.bf16.msra.mxu0 %v443
  %461 = vmatprep.subr.bf16.mxu0 0
  %462 = vmatpush1.bf16.msra.mxu0 %v442
  %463 = vmatprep.subr.bf16.mxu0 0
  %464 = vmatpush1.bf16.msra.mxu0 %v441
  %465 = vmatprep.subr.bf16.mxu0 0
  %466 = vmatpush2.bf16.msra.mxu0 0
  %467 = vmatprep.subr.bf16.mxu0 0
  %468 = vmatpush2.bf16.msra.mxu0 0
  %469 = vmatprep.subr.bf16.mxu0 0
  %470 = vmatpush2.bf16.msra.mxu0 0
  %471 = vmatprep.subr.bf16.mxu0 0
  %472 = vmatpush2.bf16.msra.mxu0 0
  %473 = vmatprep.subr.bf16.mxu0 0
  %474 = vmatpush2.bf16.msra.mxu0 0
  %475 = vmatprep.subr.bf16.mxu0 0
  %476 = vmatpush2.bf16.msra.mxu0 0
  %477 = vmatprep.subr.bf16.mxu0 0
  %478 = vmatpush2.bf16.msra.mxu0 0
  %479 = vmatprep.subr.bf16.mxu0 0
  %480 = vmatpush2.bf16.msra.mxu0 0
  %481 = vmatprep.mubr.bf16.mxu0 0
  %482 = vmatmul.mubr.bf16.gmra.mxu0 %v88
  %v483 = vpop.f32.mrf.mxu0
  %v484 = vadd.f32 0.0, %v483
  %v485 = vpop.f32.mrf.mxu0
  %v486 = vpop.f32.mrf.mxu0
  %v487 = vadd.f32 0.0, %v486
  %v488 = vpop.f32.mrf.mxu0
  %489 = vmatprep.mubr.bf16.mxu0 0
  %490 = vmatmul.mubr.bf16.gmra.mxu0 %v89
  %v491 = vpop.f32.mrf.mxu0
  %v492 = vadd.f32 0.0, %v491
  %v493 = vpop.f32.mrf.mxu0
  %v494 = vpop.f32.mrf.mxu0
  %v495 = vadd.f32 0.0, %v494
  %v496 = vpop.f32.mrf.mxu0
  %497 = vmatprep.mubr.bf16.mxu0 0
  %498 = vmatmul.mubr.bf16.gmra.mxu0 %v90
  %v499 = vpop.f32.mrf.mxu0
  %v500 = vadd.f32 0.0, %v499
  %v501 = vpop.f32.mrf.mxu0
  %v502 = vpop.f32.mrf.mxu0
  %v503 = vadd.f32 0.0, %v502
  %v504 = vpop.f32.mrf.mxu0
  %505 = vmatprep.mubr.bf16.mxu0 0
  %506 = vmatmul.mubr.bf16.gmra.mxu0 %v91
  %v507 = vpop.f32.mrf.mxu0
  %v508 = vadd.f32 0.0, %v507
  %v509 = vpop.f32.mrf.mxu0
  %v510 = vpop.f32.mrf.mxu0
  %v511 = vadd.f32 0.0, %v510
  %v512 = vpop.f32.mrf.mxu0
  %513 = vmatprep.mubr.bf16.mxu0 0
  %514 = vmatmul.mubr.bf16.gmra.mxu0 %v92
  %v515 = vpop.f32.mrf.mxu0
  %v516 = vadd.f32 0.0, %v515
  %v517 = vpop.f32.mrf.mxu0
  %v518 = vpop.f32.mrf.mxu0
  %v519 = vadd.f32 0.0, %v518
  %v520 = vpop.f32.mrf.mxu0
  %521 = vmatprep.mubr.bf16.mxu0 0
  %522 = vmatmul.mubr.bf16.gmra.mxu0 %v93
  %v523 = vpop.f32.mrf.mxu0
  %v524 = vadd.f32 0.0, %v523
  %v525 = vpop.f32.mrf.mxu0
  %v526 = vpop.f32.mrf.mxu0
  %v527 = vadd.f32 0.0, %v526
  %v528 = vpop.f32.mrf.mxu0
  %529 = vmatprep.mubr.bf16.mxu0 0
  %530 = vmatmul.mubr.bf16.gmra.mxu0 %v94
  %v531 = vpop.f32.mrf.mxu0
  %v532 = vadd.f32 0.0, %v531
  %v533 = vpop.f32.mrf.mxu0
  %v534 = vpop.f32.mrf.mxu0
  %v535 = vadd.f32 0.0, %v534
  %v536 = vpop.f32.mrf.mxu0
  %537 = vmatprep.mubr.bf16.mxu0 0
  %538 = vmatmul.mubr.bf16.gmra.mxu0 %v95
  %v539 = vpop.f32.mrf.mxu0
  %v540 = vadd.f32 0.0, %v539
  %v541 = vpop.f32.mrf.mxu0
  %v542 = vpop.f32.mrf.mxu0
  %v543 = vadd.f32 0.0, %v542
  %v544 = vpop.f32.mrf.mxu0
  %545 = vdwg.mxu0
  %v546 = vpack.c.bf16 %v487, %v484
  %v547 = vpack.c.bf16 %v495, %v492
  %v548 = vpack.c.bf16 %v503, %v500
  %v549 = vpack.c.bf16 %v511, %v508
  %v550 = vpack.c.bf16 %v519, %v516
  %v551 = vpack.c.bf16 %v527, %v524
  %v552 = vpack.c.bf16 %v535, %v532
  %v553 = vpack.c.bf16 %v543, %v540
  %v554 = vld [vmem:[%s4] sm:$0xf]
  %v555 = vld [vmem:[%s4 + $0x4] sm:$0xf]
  %v556 = vld [vmem:[%s4 + $0x8] sm:$0xf]
  %v557 = vld [vmem:[%s4 + $0xc] sm:$0xf]
  %v558 = vld [vmem:[%s4 + $0x10] sm:$0xf]
  %v559 = vld [vmem:[%s4 + $0x14] sm:$0xf]
  %v560 = vld [vmem:[%s4 + $0x18] sm:$0xf]
  %v561 = vld [vmem:[%s4 + $0x1c] sm:$0xf]
  %v562 = vld [vmem:[%s4 + $0x20] sm:$0xf]
  %v563 = vld [vmem:[%s4 + $0x24] sm:$0xf]
  %v564 = vld [vmem:[%s4 + $0x28] sm:$0xf]
  %v565 = vld [vmem:[%s4 + $0x2c] sm:$0xf]
  %v566 = vld [vmem:[%s4 + $0x30] sm:$0xf]
  %v567 = vld [vmem:[%s4 + $0x34] sm:$0xf]
  %v568 = vld [vmem:[%s4 + $0x38] sm:$0xf]
  %v569 = vld [vmem:[%s4 + $0x3c] sm:$0xf]
  %v570 = vld [vmem:[%s5] sm:$0x1]
  %v572 = vlaneseq
  %v573 = vshrl.u32 %v572, 7
  %v574 = vsub.s32 0, %v573
  %v575 = vrot.slane %v570, %v574
  %v593 = vunpack.c.l.b16 %v554
  %v594 = vunpack.c.l.b16 %v555
  %v595 = vunpack.c.l.b16 %v556
  %v596 = vunpack.c.l.b16 %v557
  %v597 = vunpack.c.l.b16 %v558
  %v598 = vunpack.c.l.b16 %v559
  %v599 = vunpack.c.l.b16 %v560
  %v600 = vunpack.c.l.b16 %v561
  %v601 = vunpack.c.l.b16 %v562
  %v602 = vunpack.c.l.b16 %v563
  %v603 = vunpack.c.l.b16 %v564
  %v604 = vunpack.c.l.b16 %v565
  %v605 = vunpack.c.l.b16 %v566
  %v606 = vunpack.c.l.b16 %v567
  %v607 = vunpack.c.l.b16 %v568
  %v608 = vunpack.c.l.b16 %v569
  %v609 = vpack.c.b16 %v594, %v593
  %v610 = vpack.c.b16 %v596, %v595
  %v611 = vpack.c.b16 %v598, %v597
  %v612 = vpack.c.b16 %v600, %v599
  %v613 = vpack.c.b16 %v602, %v601
  %v614 = vpack.c.b16 %v604, %v603
  %v615 = vpack.c.b16 %v606, %v605
  %v616 = vpack.c.b16 %v608, %v607
  %625 = vmatprep.subr.bf16.mxu0 0
  %626 = vmatpush1.bf16.msra.mxu0 %v616
  %627 = vmatprep.subr.bf16.mxu0 0
  %628 = vmatpush1.bf16.msra.mxu0 %v615
  %629 = vmatprep.subr.bf16.mxu0 0
  %630 = vmatpush1.bf16.msra.mxu0 %v614
  %631 = vmatprep.subr.bf16.mxu0 0
  %632 = vmatpush1.bf16.msra.mxu0 %v613
  %633 = vmatprep.subr.bf16.mxu0 0
  %634 = vmatpush1.bf16.msra.mxu0 %v612
  %635 = vmatprep.subr.bf16.mxu0 0
  %636 = vmatpush1.bf16.msra.mxu0 %v611
  %637 = vmatprep.subr.bf16.mxu0 0
  %638 = vmatpush1.bf16.msra.mxu0 %v610
  %639 = vmatprep.subr.bf16.mxu0 0
  %640 = vmatpush1.bf16.msra.mxu0 %v609
  %641 = vmatprep.subr.bf16.mxu0 0
  %642 = vmatpush2.bf16.msra.mxu0 0
  %643 = vmatprep.subr.bf16.mxu0 0
  %644 = vmatpush2.bf16.msra.mxu0 0
  %645 = vmatprep.subr.bf16.mxu0 0
  %646 = vmatpush2.bf16.msra.mxu0 0
  %647 = vmatprep.subr.bf16.mxu0 0
  %648 = vmatpush2.bf16.msra.mxu0 0
  %649 = vmatprep.subr.bf16.mxu0 0
  %650 = vmatpush2.bf16.msra.mxu0 0
  %651 = vmatprep.subr.bf16.mxu0 0
  %652 = vmatpush2.bf16.msra.mxu0 0
  %653 = vmatprep.subr.bf16.mxu0 0
  %654 = vmatpush2.bf16.msra.mxu0 0
  %655 = vmatprep.subr.bf16.mxu0 0
  %656 = vmatpush2.bf16.msra.mxu0 0
  %657 = vmatprep.mubr.bf16.mxu0 0
  %658 = vmatmul.mubr.bf16.gmra.mxu0 %v546
  %v659 = vpop.f32.mrf.mxu0
  %v660 = vadd.f32 %v575, %v659
  %v661 = vpop.f32.mrf.mxu0
  %v662 = vpop.f32.mrf.mxu0
  %v663 = vadd.f32 %v575, %v662
  %v664 = vpop.f32.mrf.mxu0
  %665 = vmatprep.mubr.bf16.mxu0 0
  %666 = vmatmul.mubr.bf16.gmra.mxu0 %v547
  %v667 = vpop.f32.mrf.mxu0
  %v668 = vadd.f32 %v575, %v667
  %v669 = vpop.f32.mrf.mxu0
  %v670 = vpop.f32.mrf.mxu0
  %v671 = vadd.f32 %v575, %v670
  %v672 = vpop.f32.mrf.mxu0
  %673 = vmatprep.mubr.bf16.mxu0 0
  %674 = vmatmul.mubr.bf16.gmra.mxu0 %v548
  %v675 = vpop.f32.mrf.mxu0
  %v676 = vadd.f32 %v575, %v675
  %v677 = vpop.f32.mrf.mxu0
  %v678 = vpop.f32.mrf.mxu0
  %v679 = vadd.f32 %v575, %v678
  %v680 = vpop.f32.mrf.mxu0
  %681 = vmatprep.mubr.bf16.mxu0 0
  %682 = vmatmul.mubr.bf16.gmra.mxu0 %v549
  %v683 = vpop.f32.mrf.mxu0
  %v684 = vadd.f32 %v575, %v683
  %v685 = vpop.f32.mrf.mxu0
  %v686 = vpop.f32.mrf.mxu0
  %v687 = vadd.f32 %v575, %v686
  %v688 = vpop.f32.mrf.mxu0
  %689 = vmatprep.mubr.bf16.mxu0 0
  %690 = vmatmul.mubr.bf16.gmra.mxu0 %v550
  %v691 = vpop.f32.mrf.mxu0
  %v692 = vadd.f32 %v575, %v691
  %v693 = vpop.f32.mrf.mxu0
  %v694 = vpop.f32.mrf.mxu0
  %v695 = vadd.f32 %v575, %v694
  %v696 = vpop.f32.mrf.mxu0
  %697 = vmatprep.mubr.bf16.mxu0 0
  %698 = vmatmul.mubr.bf16.gmra.mxu0 %v551
  %v699 = vpop.f32.mrf.mxu0
  %v700 = vadd.f32 %v575, %v699
  %v701 = vpop.f32.mrf.mxu0
  %v702 = vpop.f32.mrf.mxu0
  %v703 = vadd.f32 %v575, %v702
  %v704 = vpop.f32.mrf.mxu0
  %705 = vmatprep.mubr.bf16.mxu0 0
  %706 = vmatmul.mubr.bf16.gmra.mxu0 %v552
  %v707 = vpop.f32.mrf.mxu0
  %v708 = vadd.f32 %v575, %v707
  %v709 = vpop.f32.mrf.mxu0
  %v710 = vpop.f32.mrf.mxu0
  %v711 = vadd.f32 %v575, %v710
  %v712 = vpop.f32.mrf.mxu0
  %713 = vmatprep.mubr.bf16.mxu0 0
  %714 = vmatmul.mubr.bf16.gmra.mxu0 %v553
  %v715 = vpop.f32.mrf.mxu0
  %v716 = vadd.f32 %v575, %v715
  %v717 = vpop.f32.mrf.mxu0
  %v718 = vpop.f32.mrf.mxu0
  %v719 = vadd.f32 %v575, %v718
  %v720 = vpop.f32.mrf.mxu0
  %721 = vdwg.mxu0
  %722 = vst [vmem:[%s6] sm:$0xff] %v660
  %723 = vst [vmem:[%s6 + $0x8] sm:$0xff] %v663
  %724 = vst [vmem:[%s6 + $0x10] sm:$0xff] %v668
  %725 = vst [vmem:[%s6 + $0x18] sm:$0xff] %v671
  %726 = vst [vmem:[%s6 + $0x20] sm:$0xff] %v676
  %727 = vst [vmem:[%s6 + $0x28] sm:$0xff] %v679
  %728 = vst [vmem:[%s6 + $0x30] sm:$0xff] %v684
  %729 = vst [vmem:[%s6 + $0x38] sm:$0xff] %v687
  %730 = vst [vmem:[%s6 + $0x40] sm:$0xff] %v692
  %731 = vst [vmem:[%s6 + $0x48] sm:$0xff] %v695
  %732 = vst [vmem:[%s6 + $0x50] sm:$0xff] %v700
  %733 = vst [vmem:[%s6 + $0x58] sm:$0xff] %v703
  %734 = vst [vmem:[%s6 + $0x60] sm:$0xff] %v708
  %735 = vst [vmem:[%s6 + $0x68] sm:$0xff] %v711
  %736 = vst [vmem:[%s6 + $0x70] sm:$0xff] %v716
  %737 = vst [vmem:[%s6 + $0x78] sm:$0xff] %v719
  // Predicated region
  $region26: #{gcn_model_forward.1} parent=0 // pred_check
    _
  $region27: #{gcn_model_forward.1} parent=0 // pred_check_branch
    %739 = sbr.rel (0) target = $region29
  $region28: #{gcn_model_forward.1} parent=0 // pred_region
    _
  $region29: #{gcn_model_forward.1} parent=0 // pred_fallthru
    _
  // Predicated region
  $region30: #{gcn_model_forward.1} parent=0 // pred_check
    _
  $region31: #{gcn_model_forward.1} parent=0 // pred_check_branch
    %741 = sbr.rel (0) target = $region33
  $region32: #{gcn_model_forward.1} parent=0 // pred_region
    _
  $region33: #{gcn_model_forward.1} parent=0 // pred_fallthru
    _

</llo_original>
